<compile_context>
chip_gen: v5e
topology: v5e:2x2
jax: 0.10.0
libtpu: 0.0.40
codegen_flags: <defaults>
</compile_context>

<pallas_src>
import jax
import jax.numpy as jnp
import numpy as np
from jax import lax
from jax.experimental import pallas as pl
from jax.experimental.pallas import tpu as pltpu


# ----------------------------------------------------------------------------
# Pallas kernel: one (C, T) spatial strip of one image
# ----------------------------------------------------------------------------
def _pa_layer_kernel(x_ref, w1_ref, b1_ref, w2_ref, b2_ref, o_ref):
    x = x_ref[...]                                                     # (C, T) f32

    # 1x1 conv #1 (channel mix C -> Cmid) + bias + ReLU.
    h = jnp.dot(w1_ref[...], x, preferred_element_type=jnp.float32)   # (Cmid, T)
    h = jnp.maximum(h + b1_ref[...], 0.0)

    # 1x1 conv #2 (Cmid -> 1): broadcast FMA + sublane reduce (skip tiny MXU pass).
    z = jnp.sum(h * w2_ref[...], axis=0, keepdims=True) + b2_ref[...]  # (1, T)
    y = 1.0 / (1.0 + jnp.exp(-z))                                      # sigmoid

    # Pixel attention: gate every channel of x with the per-pixel weight y.
    o_ref[...] = (x * y).astype(o_ref.dtype)


def _pick_spatial_tile(hw, max_tile=8 * 1024):
    """Largest lane-dense (multiple-of-128) divisor of hw up to max_tile."""
    if hw <= max_tile:
        return hw
    start = max_tile - (max_tile % 128)
    for t in range(start, 127, -128):
        if hw % t == 0:
            return t
    return hw


def pa_layer_pallas(x_flat, w1, b1, w2t, b2):
    """x_flat: (N, C, HW) f32.  w1: (Cmid, C); b1: (Cmid, 1); w2t: (Cmid, 1); b2: (1, 1)."""
    N, C, HW = x_flat.shape
    Cmid = w1.shape[0]
    T = _pick_spatial_tile(HW)
    grid = (N, HW // T)

    def pspec(shape):
        return pl.BlockSpec(shape, lambda n, s: (0,) * len(shape))

    return pl.pallas_call(
        _pa_layer_kernel,
        out_shape=jax.ShapeDtypeStruct((N, C, HW), jnp.float32),
        grid=grid,
        in_specs=[
            pl.BlockSpec((None, C, T), lambda n, s: (n, 0, s)),   # x strip
            pspec((Cmid, C)),                                     # conv1 weight
            pspec((Cmid, 1)),                                     # conv1 bias
            pspec((Cmid, 1)),                                     # conv2 weight (as column)
            pspec((1, 1)),                                        # conv2 bias
        ],
        out_specs=pl.BlockSpec((None, C, T), lambda n, s: (n, 0, s)),
        compiler_params=pltpu.CompilerParams(
            dimension_semantics=("parallel", "parallel")),
    )(x_flat, w1, b1, w2t, b2)


def pa_layer_forward(x_nchw, w1, b1, w2, b2):
    """PALayer.forward on an NCHW input with PyTorch-style conv parameters.

    w1: (Cmid, C, 1, 1), b1: (Cmid,), w2: (1, Cmid, 1, 1), b2: (1,).
    """
    N, C, H, W = x_nchw.shape
    Cmid = w1.shape[0]

    x_flat = x_nchw.reshape(N, C, H * W)                  # pure reshape, no transpose
    w1_k = w1.reshape(Cmid, C).astype(jnp.float32)
    b1_k = b1.reshape(Cmid, 1).astype(jnp.float32)
    w2_k = w2.reshape(1, Cmid).T.astype(jnp.float32)      # (Cmid, 1) column
    b2_k = b2.reshape(1, 1).astype(jnp.float32)

    out_flat = pa_layer_pallas(x_flat.astype(jnp.float32), w1_k, b1_k, w2_k, b2_k)
    return out_flat.reshape(N, C, H, W)


# ----------------------------------------------------------------------------
# Pure-JAX reference (matches the PyTorch module, f32)
# ----------------------------------------------------------------------------
def reference_pa_layer(x, w1, b1, w2, b2):
    h = lax.conv_general_dilated(
        x, w1, (1, 1), 'VALID',
        dimension_numbers=('NCHW', 'OIHW', 'NCHW'),
        precision=lax.Precision.HIGHEST)
    h = jnp.maximum(h + b1[None, :, None, None], 0.0)
    z = lax.conv_general_dilated(
        h, w2, (1, 1), 'VALID',
        dimension_numbers=('NCHW', 'OIHW', 'NCHW'),
        precision=lax.Precision.HIGHEST)
    y = 1.0 / (1.0 + jnp.exp(-(z + b2[None, :, None, None])))
    return x * y


# ----------------------------------------------------------------------------
if __name__ == "__main__":
    key = jax.random.PRNGKey(0)
    ks = jax.random.split(key, 5)

    # channel=32 -> channel//8 = 4 (smallest clean PALayer configuration).
    N, C, H, W = 2, 32, 16, 16
    Cmid = C // 8

    x = jax.random.normal(ks[0], (N, C, H, W), jnp.float32)
    w1 = jax.random.normal(ks[1], (Cmid, C, 1, 1), jnp.float32) * 0.2
    b1 = jax.random.normal(ks[2], (Cmid,), jnp.float32) * 0.1
    w2 = jax.random.normal(ks[3], (1, Cmid, 1, 1), jnp.float32) * 0.2
    b2 = jax.random.normal(ks[4], (1,), jnp.float32) * 0.1

    out = pa_layer_forward(x, w1, b1, w2, b2)
    out = jax.block_until_ready(out)
    assert out.shape == (N, C, H, W)

    ref = reference_pa_layer(x, w1, b1, w2, b2)
    np.testing.assert_allclose(np.asarray(out), np.asarray(ref),
                               rtol=1e-5, atol=1e-5)

    print("KERNEL_OK")
</pallas_src>

<mosaic_0001>
module attributes {stable_mosaic.version = 11 : i64} {
  func.func @_pa_layer_kernel(%arg0: i32, %arg1: i32, %arg2: memref<1x32x256xf32, #tpu.memory_space<vmem>>, %arg3: memref<4x32xf32, #tpu.memory_space<vmem>>, %arg4: memref<4x1xf32, #tpu.memory_space<vmem>>, %arg5: memref<4x1xf32, #tpu.memory_space<vmem>>, %arg6: memref<1x1xf32, #tpu.memory_space<vmem>>, %arg7: memref<1x32x256xf32, #tpu.memory_space<vmem>>) attributes {dimension_semantics = [#tpu.dimension_semantics<parallel>, #tpu.dimension_semantics<parallel>], iteration_bounds = array<i64: 2, 1>, scalar_prefetch = 0 : i64, scratch_operands = 0 : i64, tpu.core_type = #tpu.core_type<tc>, window_params = [{transform_indices = @transform_0, window_bounds = array<i64: 1, 32, 256>}, {pipeline_mode = #tpu.pipeline_mode<synchronous>, transform_indices = @transform_1, window_bounds = array<i64: 4, 32>}, {pipeline_mode = #tpu.pipeline_mode<synchronous>, transform_indices = @transform_2, window_bounds = array<i64: 4, 1>}, {pipeline_mode = #tpu.pipeline_mode<synchronous>, transform_indices = @transform_3, window_bounds = array<i64: 4, 1>}, {pipeline_mode = #tpu.pipeline_mode<synchronous>, transform_indices = @transform_4, window_bounds = array<i64: 1, 1>}, {transform_indices = @transform_5, window_bounds = array<i64: 1, 32, 256>}]} {
    %c0 = arith.constant 0 : index
    %c0_0 = arith.constant 0 : index
    %c0_1 = arith.constant 0 : index
    %0 = vector.load %arg2[%c0, %c0_0, %c0_1] : memref<1x32x256xf32, #tpu.memory_space<vmem>>, vector<1x32x256xf32>
    %1 = vector.shape_cast %0 : vector<1x32x256xf32> to vector<32x256xf32>
    %c0_2 = arith.constant 0 : index
    %c0_3 = arith.constant 0 : index
    %2 = vector.load %arg3[%c0_2, %c0_3] : memref<4x32xf32, #tpu.memory_space<vmem>>, vector<4x32xf32>
    %cst = arith.constant dense<0.000000e+00> : vector<4x256xf32>
    %3 = tpu.matmul %2, %1, %cst {dimension_numbers = #tpu.dot_dimension_numbers<[1], [0], [0], [1], [0, 0, 1, 1], [], []>} : vector<4x32xf32>, vector<32x256xf32>, vector<4x256xf32> -> vector<4x256xf32>
    %c0_4 = arith.constant 0 : index
    %c0_5 = arith.constant 0 : index
    %4 = vector.load %arg4[%c0_4, %c0_5] : memref<4x1xf32, #tpu.memory_space<vmem>>, vector<4x1xf32>
    %5 = vector.broadcast %4 : vector<4x1xf32> to vector<4x256xf32>
    %6 = arith.addf %3, %5 : vector<4x256xf32>
    %cst_6 = arith.constant 0.000000e+00 : f32
    %7 = vector.broadcast %cst_6 : f32 to vector<4x256xf32>
    %8 = arith.maximumf %6, %7 : vector<4x256xf32>
    %c0_7 = arith.constant 0 : index
    %c0_8 = arith.constant 0 : index
    %9 = vector.load %arg5[%c0_7, %c0_8] : memref<4x1xf32, #tpu.memory_space<vmem>>, vector<4x1xf32>
    %10 = vector.broadcast %9 : vector<4x1xf32> to vector<4x256xf32>
    %11 = arith.mulf %8, %10 : vector<4x256xf32>
    %cst_9 = arith.constant dense<0.000000e+00> : vector<256xf32>
    %12 = vector.multi_reduction <add>, %11, %cst_9 [0] : vector<4x256xf32> to vector<256xf32>
    %13 = vector.shape_cast %12 : vector<256xf32> to vector<1x256xf32>
    %c0_10 = arith.constant 0 : index
    %c0_11 = arith.constant 0 : index
    %14 = vector.load %arg6[%c0_10, %c0_11] : memref<1x1xf32, #tpu.memory_space<vmem>>, vector<1x1xf32>
    %15 = vector.broadcast %14 : vector<1x1xf32> to vector<1x256xf32>
    %16 = arith.addf %13, %15 : vector<1x256xf32>
    %cst_12 = arith.constant 0.000000e+00 : f32
    %17 = vector.broadcast %cst_12 : f32 to vector<1x256xf32>
    %18 = arith.subf %17, %16 : vector<1x256xf32>
    %19 = math.exp %18 : vector<1x256xf32>
    %cst_13 = arith.constant 1.000000e+00 : f32
    %20 = vector.broadcast %cst_13 : f32 to vector<1x256xf32>
    %21 = arith.addf %20, %19 : vector<1x256xf32>
    %cst_14 = arith.constant 1.000000e+00 : f32
    %22 = vector.broadcast %cst_14 : f32 to vector<1x256xf32>
    %23 = arith.divf %22, %21 : vector<1x256xf32>
    %24 = vector.broadcast %23 : vector<1x256xf32> to vector<32x256xf32>
    %25 = arith.mulf %1, %24 : vector<32x256xf32>
    %c0_15 = arith.constant 0 : index
    %c0_16 = arith.constant 0 : index
    %c0_17 = arith.constant 0 : index
    %26 = vector.load %arg7[%c0_15, %c0_16, %c0_17] : memref<1x32x256xf32, #tpu.memory_space<vmem>>, vector<1x32x256xf32>
    %27 = vector.shape_cast %26 : vector<1x32x256xf32> to vector<32x256xf32>
    %28 = vector.shape_cast %25 : vector<32x256xf32> to vector<1x32x256xf32>
    tpu.vector_store %arg7[%c0_15, %c0_16, %c0_17], %28 {strides = array<i32>} : memref<1x32x256xf32, #tpu.memory_space<vmem>>, vector<1x32x256xf32>,
    return
  }
  func.func @transform_0(%arg0: i32, %arg1: i32) -> (i32, i32, i32) {
    %c0_i32 = arith.constant 0 : i32
    %c0_i32_0 = arith.constant 0 : i32
    return %arg0, %c0_i32, %arg1 : i32, i32, i32
  }
  func.func @transform_1(%arg0: i32, %arg1: i32) -> (i32, i32) {
    %c0_i32 = arith.constant 0 : i32
    %c0_i32_0 = arith.constant 0 : i32
    %c0_i32_1 = arith.constant 0 : i32
    return %c0_i32, %c0_i32_0 : i32, i32
  }
  func.func @transform_2(%arg0: i32, %arg1: i32) -> (i32, i32) {
    %c0_i32 = arith.constant 0 : i32
    %c0_i32_0 = arith.constant 0 : i32
    %c0_i32_1 = arith.constant 0 : i32
    return %c0_i32, %c0_i32_0 : i32, i32
  }
  func.func @transform_3(%arg0: i32, %arg1: i32) -> (i32, i32) {
    %c0_i32 = arith.constant 0 : i32
    %c0_i32_0 = arith.constant 0 : i32
    %c0_i32_1 = arith.constant 0 : i32
    return %c0_i32, %c0_i32_0 : i32, i32
  }
  func.func @transform_4(%arg0: i32, %arg1: i32) -> (i32, i32) {
    %c0_i32 = arith.constant 0 : i32
    %c0_i32_0 = arith.constant 0 : i32
    %c0_i32_1 = arith.constant 0 : i32
    return %c0_i32, %c0_i32_0 : i32, i32
  }
  func.func @transform_5(%arg0: i32, %arg1: i32) -> (i32, i32, i32) {
    %c0_i32 = arith.constant 0 : i32
    %c0_i32_0 = arith.constant 0 : i32
    return %arg0, %c0_i32, %arg1 : i32, i32, i32
  }
}

</mosaic_0001>

<llo_original>
// kernel: tpu_custom_call.1
$region0: #{tpu_custom_call.1}
  #allocation0 [shape = 'u32[]', space=smem, size = 0x4, offset = 0x4, fixed_abs, tag = 'smem constant byte address 0x4 - core index']
  #allocation1 [shape = 'u32[72,128]{1,0:T(1,128)}', space=vmem, size = 0x9000, scoped, tag = 'internal scratch']
  #allocation2 [shape = 'f32[1,1]{1,0:T(1,128)S(1)}', space=vmem, size = 0x200, scoped, tag = 'scoped memory for tpu_custom_call.1']
  %s0 = inlined_call_operand.hbm [shape: f32[2,32,256], index: 0, kind: input, shape index: {}]
  %s1 = inlined_call_operand.vmem [shape: f32[4,32], index: 1, kind: input, shape index: {}]
  %s2 = inlined_call_operand.vmem [shape: f32[4,1], index: 2, kind: input, shape index: {}]
  %s3 = inlined_call_operand.vmem [shape: f32[4,1], index: 3, kind: input, shape index: {}]
  %s4 = inlined_call_operand.<no memory space> [shape: f32[1,1], index: 4, kind: input, shape index: {}]
  %s5 = inlined_call_operand.hbm [shape: f32[2,32,256], index: 5, kind: output, shape index: {}]
  %s6 = sld [smem:[#allocation0]]
  $region57: #{tpu_custom_call.1} parent=0
    _
  %s8 = ssub.s32 1, %s6
  %s9 = scalar_select 0, %s8, %s6
  %v10 = vstv %s4
  %11 = vst [vmem:[#allocation2] sm:$0x1] %v10
  $region1: #{tpu_custom_call.1} parent=0
    #allocation3 [shape = 'u8[65536]{0}', space=vmem, size = 0x10000, scoped, tag = 'input window, operand 0']
    #allocation4 [shape = 's32[2]{0}', space=sflag, size = 0x8, scoped, tag = 'scoped memory for tpu_custom_call.1']
    #allocation5 [shape = 's32[2]{0}', space=sflag, size = 0x8, scoped, tag = 'scoped memory for tpu_custom_call.1']
    #allocation6 [shape = 'u8[65536]{0}', space=vmem, size = 0x10000, scoped, tag = 'output window, operand 0']
    %12 = vsyncpa [#allocation4], 0
    %s13 = scalar_lea.sflag [#allocation4], 1
    %14 = vsyncpa %s13, 0
    %15 = vsyncpa [#allocation5], 0
    %s16 = scalar_lea.sflag [#allocation5], 1
    %17 = vsyncpa %s16, 0
    loop: start=0, step=1, limit=4
    $region2: #{tpu_custom_call.1} parent=1 // loop_pre_header
      _
    $region3: #{tpu_custom_call.1} parent=1 // loop_header
      %s19 = sphi 0, %s23
      %p20 = scmp.ge.s32.totalorder %s19, 4
      %s26 = sphi 0, %s38
      %s27 = sphi 0, %s34
      %s28 = sphi 0, %s26
      %s29 = sphi 0, %s27
      %s30 = sphi 0, %s28
      %s31 = sphi 0, %s29
      %s43 = sphi 0, %s45
      %s46 = sphi 0, %s43
      %s47 = sphi 0, %s46
      %s63 = sphi 0, %s47
      %s67 = sphi 0, %s67
      %s69 = sphi 0, %s67
      %s70 = sphi 0, %s69
      %s84 = sphi 0, %s70
      %s88 = sphi 0, %s88
      %s90 = sphi 0, %s88
      %s91 = sphi 0, %s90
      %s105 = sphi 0, %s91
      %s109 = sphi 0, %s109
      %s111 = sphi 0, %s109
      %s112 = sphi 0, %s111
      %s126 = sphi 0, %s112
      %s130 = sphi 0, %s130
      %s132 = sphi 0, %s130
      %s133 = sphi 0, %s132
      %s147 = sphi 0, %s133
      %s155 = sphi 0, %s157
      %s158 = sphi 0, %s155
      %s159 = sphi 0, %s158
      %s175 = sphi 0, %s159
    $region4: #{tpu_custom_call.1} parent=1 // loop_header_branch
      %22 = sbr.rel (%p20) target = $region8
    $region5: #{tpu_custom_call.1} parent=1 // loop_body
      %s24 = ssub.s32 %s19, 1
      %s25 = ssub.s32 %s19, 2
      %s32 = sadd.s32 1, %s27
      %p33 = scmp.ge.s32.totalorder %s32, 1
      %s34 = scalar_select %p33, 0, %s32
      %s35 = sadd.s32 1, %s26
      %s36 = scalar_select %p33, %s35, %s26
      %p37 = scmp.ge.s32.totalorder %s36, 2
      %s38 = scalar_select %p37, 0, %s36
      %s39 = ssub.s32 %s26, %s38
      %s40 = ssub.s32 %s27, %s34
      %s41 = sor.u32 %s39, %s40
      %p42 = scmp.eq.s32.totalorder %s41, 0
      %s44 = sadd.s32 %s43, 1
      %s45 = scalar_select %p42, %s43, %s44
      %p48 = pneg %p42
      %p49 = scmp.eq.s32.totalorder %s19, 1
      %p50 = por %p48, %p49
      %p51 = scmp.ne.s32.totalorder %s43, %s46
      %p52 = scmp.eq.s32.totalorder %s19, 0
      %p53 = por %p51, %p52
      %p54 = scmp.ne.s32.totalorder %s43, %s46
      %p55 = scmp.eq.s32.totalorder %s24, 1
      %p56 = por %p54, %p55
      %p57 = scmp.ne.s32.totalorder %s46, %s47
      %p58 = scmp.eq.s32.totalorder %s24, 0
      %p59 = por %p57, %p58
      %p60 = scmp.ne.s32.totalorder %s46, %s47
      %p61 = scmp.eq.s32.totalorder %s25, 1
      %p62 = por %p60, %p61
      %p64 = scmp.ne.s32.totalorder %s47, %s63
      %p65 = scmp.eq.s32.totalorder %s25, 0
      %p66 = por %p64, %p65
      %s68 = sadd.s32 %s67, 1
      %p71 = scmp.eq.s32.totalorder %s19, 1
      %p72 = scmp.ne.s32.totalorder %s67, %s69
      %p73 = scmp.eq.s32.totalorder %s19, 0
      %p74 = por %p72, %p73
      %p75 = scmp.ne.s32.totalorder %s67, %s69
      %p76 = scmp.eq.s32.totalorder %s24, 1
      %p77 = por %p75, %p76
      %p78 = scmp.ne.s32.totalorder %s69, %s70
      %p79 = scmp.eq.s32.totalorder %s24, 0
      %p80 = por %p78, %p79
      %p81 = scmp.ne.s32.totalorder %s69, %s70
      %p82 = scmp.eq.s32.totalorder %s25, 1
      %p83 = por %p81, %p82
      %p85 = scmp.ne.s32.totalorder %s70, %s84
      %p86 = scmp.eq.s32.totalorder %s25, 0
      %p87 = por %p85, %p86
      %s89 = sadd.s32 %s88, 1
      %p92 = scmp.eq.s32.totalorder %s19, 1
      %p93 = scmp.ne.s32.totalorder %s88, %s90
      %p94 = scmp.eq.s32.totalorder %s19, 0
      %p95 = por %p93, %p94
      %p96 = scmp.ne.s32.totalorder %s88, %s90
      %p97 = scmp.eq.s32.totalorder %s24, 1
      %p98 = por %p96, %p97
      %p99 = scmp.ne.s32.totalorder %s90, %s91
      %p100 = scmp.eq.s32.totalorder %s24, 0
      %p101 = por %p99, %p100
      %p102 = scmp.ne.s32.totalorder %s90, %s91
      %p103 = scmp.eq.s32.totalorder %s25, 1
      %p104 = por %p102, %p103
      %p106 = scmp.ne.s32.totalorder %s91, %s105
      %p107 = scmp.eq.s32.totalorder %s25, 0
      %p108 = por %p106, %p107
      %s110 = sadd.s32 %s109, 1
      %p113 = scmp.eq.s32.totalorder %s19, 1
      %p114 = scmp.ne.s32.totalorder %s109, %s111
      %p115 = scmp.eq.s32.totalorder %s19, 0
      %p116 = por %p114, %p115
      %p117 = scmp.ne.s32.totalorder %s109, %s111
      %p118 = scmp.eq.s32.totalorder %s24, 1
      %p119 = por %p117, %p118
      %p120 = scmp.ne.s32.totalorder %s111, %s112
      %p121 = scmp.eq.s32.totalorder %s24, 0
      %p122 = por %p120, %p121
      %p123 = scmp.ne.s32.totalorder %s111, %s112
      %p124 = scmp.eq.s32.totalorder %s25, 1
      %p125 = por %p123, %p124
      %p127 = scmp.ne.s32.totalorder %s112, %s126
      %p128 = scmp.eq.s32.totalorder %s25, 0
      %p129 = por %p127, %p128
      %s131 = sadd.s32 %s130, 1
      %p134 = scmp.eq.s32.totalorder %s19, 1
      %p135 = scmp.ne.s32.totalorder %s130, %s132
      %p136 = scmp.eq.s32.totalorder %s19, 0
      %p137 = por %p135, %p136
      %p138 = scmp.ne.s32.totalorder %s130, %s132
      %p139 = scmp.eq.s32.totalorder %s24, 1
      %p140 = por %p138, %p139
      %p141 = scmp.ne.s32.totalorder %s132, %s133
      %p142 = scmp.eq.s32.totalorder %s24, 0
      %p143 = por %p141, %p142
      %p144 = scmp.ne.s32.totalorder %s132, %s133
      %p145 = scmp.eq.s32.totalorder %s25, 1
      %p146 = por %p144, %p145
      %p148 = scmp.ne.s32.totalorder %s133, %s147
      %p149 = scmp.eq.s32.totalorder %s25, 0
      %p150 = por %p148, %p149
      %s151 = ssub.s32 %s26, %s38
      %s152 = ssub.s32 %s27, %s34
      %s153 = sor.u32 %s151, %s152
      %p154 = scmp.eq.s32.totalorder %s153, 0
      %s156 = sadd.s32 %s155, 1
      %s157 = scalar_select %p154, %s155, %s156
      %p160 = pneg %p154
      %p161 = scmp.eq.s32.totalorder %s19, 1
      %p162 = por %p160, %p161
      %p163 = scmp.ne.s32.totalorder %s155, %s158
      %p164 = scmp.eq.s32.totalorder %s19, 0
      %p165 = por %p163, %p164
      %p166 = scmp.ne.s32.totalorder %s155, %s158
      %p167 = scmp.eq.s32.totalorder %s24, 1
      %p168 = por %p166, %p167
      %p169 = scmp.ne.s32.totalorder %s158, %s159
      %p170 = scmp.eq.s32.totalorder %s24, 0
      %p171 = por %p169, %p170
      %p172 = scmp.ne.s32.totalorder %s158, %s159
      %p173 = scmp.eq.s32.totalorder %s25, 1
      %p174 = por %p172, %p173
      %p176 = scmp.ne.s32.totalorder %s159, %s175
      %p177 = scmp.eq.s32.totalorder %s25, 0
      %p178 = por %p176, %p177
      %p179 = scmp.le.s32.totalorder 1, %s19
      %p180 = scmp.lt.s32.totalorder %s19, 3
      %p181 = pnand %p179, %p180
      %p182 = pneg %p181
      // Predicated region
      $region9: #{tpu_custom_call.1} parent=5 // pred_check
        _
      $region10: #{tpu_custom_call.1} parent=5 // pred_check_branch
        %184 = sbr.rel (%p181) target = $region12
      $region11: #{tpu_custom_call.1} parent=5 // pred_region
        %s185 = ssub.s32 %s19, 1
        // Predicated region
        $region13: #{tpu_custom_call.1} parent=11 // pred_check
          %p186 = pneg %p80
        $region14: #{tpu_custom_call.1} parent=11 // pred_check_branch
          %188 = sbr.rel (%p186) target = $region16
        $region15: #{tpu_custom_call.1} parent=11 // pred_region
          _
        $region16: #{tpu_custom_call.1} parent=11 // pred_fallthru
          _
        // Predicated region
        $region17: #{tpu_custom_call.1} parent=11 // pred_check
          %p189 = pneg %p101
        $region18: #{tpu_custom_call.1} parent=11 // pred_check_branch
          %191 = sbr.rel (%p189) target = $region20
        $region19: #{tpu_custom_call.1} parent=11 // pred_region
          _
        $region20: #{tpu_custom_call.1} parent=11 // pred_fallthru
          _
        // Predicated region
        $region21: #{tpu_custom_call.1} parent=11 // pred_check
          %p192 = pneg %p122
        $region22: #{tpu_custom_call.1} parent=11 // pred_check_branch
          %194 = sbr.rel (%p192) target = $region24
        $region23: #{tpu_custom_call.1} parent=11 // pred_region
          _
        $region24: #{tpu_custom_call.1} parent=11 // pred_fallthru
          _
        // Predicated region
        $region25: #{tpu_custom_call.1} parent=11 // pred_check
          %p195 = pneg %p143
        $region26: #{tpu_custom_call.1} parent=11 // pred_check_branch
          %197 = sbr.rel (%p195) target = $region28
        $region27: #{tpu_custom_call.1} parent=11 // pred_region
          _
        $region28: #{tpu_custom_call.1} parent=11 // pred_fallthru
          _
      $region12: #{tpu_custom_call.1} parent=5 // pred_fallthru
        _
      %p198 = scmp.lt.s32.totalorder %s19, 2
      // Predicated region
      $region29: #{tpu_custom_call.1} parent=5 // pred_check
        %p199 = pneg %p198
      $region30: #{tpu_custom_call.1} parent=5 // pred_check_branch
        %201 = sbr.rel (%p199) target = $region32
      $region31: #{tpu_custom_call.1} parent=5 // pred_region
        // Predicated region
        $region33: #{tpu_custom_call.1} parent=31 // pred_check
          %p202 = pneg %p53
        $region34: #{tpu_custom_call.1} parent=31 // pred_check_branch
          %204 = sbr.rel (%p202) target = $region36
        $region35: #{tpu_custom_call.1} parent=31 // pred_region
          %s205 = sand.u32 %s43, 1
          %s206 = scalar_lea.sflag [#allocation4], %s205
          %s207 = sand.u32 %s43, 1
          %s208 = smul.addr %s207, 64
          %s209 = scalar_lea.vmem [#allocation3], %s208
          %s210 = smul.u32 2, %s27
          %212 = vsyncadd %s206, 0
          %s213 = smul.addr %s26, 8
          %s214 = sadd.s32 %s210, %s213
          %s215 = smul.addr %s214, 8
          %s216 = scalar_lea.hbm %s0, %s215
          %s217 = sshll.u32 %s216, 4
          %s218 = int_to_ptr.hbm [resolvable:$true] %s217
          %s219 = sshll.u32 %s209, 4
          %s220 = int_to_ptr.vmem [resolvable:$true] %s219
          %225 = dma.hbm_to_vmem [thread:$0]  %s218, 1024, %s220, %s206, 256, 256, 16
        $region36: #{tpu_custom_call.1} parent=31 // pred_fallthru
          _
      $region32: #{tpu_custom_call.1} parent=5 // pred_fallthru
        _
      %p226 = scmp.le.s32.totalorder 1, %s19
      %p227 = scmp.lt.s32.totalorder %s19, 3
      %p228 = pnand %p226, %p227
      %p229 = pneg %p228
      // Predicated region
      $region37: #{tpu_custom_call.1} parent=5 // pred_check
        _
      $region38: #{tpu_custom_call.1} parent=5 // pred_check_branch
        %231 = sbr.rel (%p228) target = $region40
      $region39: #{tpu_custom_call.1} parent=5 // pred_region
        %s232 = ssub.s32 %s19, 1
        %s233 = sand.u32 %s46, 1
        %s234 = scalar_lea.sflag [#allocation4], %s233
        %s235 = sand.u32 %s46, 1
        %s236 = smul.addr %s235, 64
        %s237 = scalar_lea.vmem [#allocation3], %s236
        // Predicated region
        $region41: #{tpu_custom_call.1} parent=39 // pred_check
          %p238 = pneg %p59
        $region42: #{tpu_custom_call.1} parent=39 // pred_check_branch
          %240 = sbr.rel (%p238) target = $region44
        $region43: #{tpu_custom_call.1} parent=39 // pred_region
          %242 = dma.done %s234, 1024
        $region44: #{tpu_custom_call.1} parent=39 // pred_fallthru
          _
        %s243 = sand.u32 %s46, 1
        %s244 = scalar_lea.sflag [#allocation4], %s243
        %s245 = sand.u32 %s46, 1
        %s246 = smul.addr %s245, 64
        %s247 = scalar_lea.vmem [#allocation3], %s246
        %p248 = pneg %p59
        %p249 = pneg %p56
        %p250 = pneg %p80
        %p251 = pneg %p77
        %p252 = pneg %p101
        %p253 = pneg %p98
        %p254 = pneg %p122
        %p255 = pneg %p119
        %p256 = pneg %p143
        %p257 = pneg %p140
        %p258 = pneg %p171
        %p259 = pneg %p168
        %s260 = sand.u32 %s158, 1
        %s261 = scalar_lea.sflag [#allocation5], %s260
        %s262 = sand.u32 %s158, 1
        %s263 = smul.addr %s262, 64
        %s264 = scalar_lea.vmem [#allocation6], %s263
        %s265 = smul.u32 2, %s29
        %s266 = smul.u32 2, %s29
        %v267 = vld [vmem:[%s237] sm:$0xff]
        %v268 = vld [vmem:[%s237 + $0x8] sm:$0xff]
        %v269 = vld [vmem:[%s237 + $0x10] sm:$0xff]
        %v270 = vld [vmem:[%s237 + $0x18] sm:$0xff]
        %v271 = vld [vmem:[%s237 + $0x20] sm:$0xff]
        %v272 = vld [vmem:[%s237 + $0x28] sm:$0xff]
        %v273 = vld [vmem:[%s237 + $0x30] sm:$0xff]
        %v274 = vld [vmem:[%s237 + $0x38] sm:$0xff]
        %v275 = vld [vmem:[%s1] sm:$0xf]
        %v276 = vld [vmem:[%s2] sm:$0xf]
        %278 = vset.pattern.permute.xlu0 0
        %279 = vperm.xlu0 %278, %v276
        %v280 = vpop.permute.xlu0 %279
        %vm282 = vcmask 261120
        %v284 = vsel %vm282, %v275, 0
        %286 = vmatpush.msra.mxu0 0.0
        %287 = vmatpush.msra.mxu0 0.0
        %288 = vmatpush.msra.mxu0 0.0
        %289 = vmatpush.msra.mxu0 0.0
        %290 = vmatpush.msra.mxu0 0.0
        %291 = vmatpush.msra.mxu0 0.0
        %292 = vmatpush.msra.mxu0 0.0
        %293 = vmatpush.msra.mxu0 0.0
        %294 = vmatpush.msra.mxu0 0.0
        %295 = vmatpush.msra.mxu0 0.0
        %296 = vmatpush.msra.mxu0 0.0
        %297 = vmatpush.msra.mxu0 0.0
        %298 = vmatpush.msra.mxu0 %v273
        %299 = vmatpush.msra.mxu0 %v271
        %300 = vmatpush.msra.mxu0 %v269
        %301 = vmatpush.msra.mxu0 %v267
        %302 = vmatmul.f32.gmra.mxu0 %v284
        %v303 = vpop.f32.mrf.mxu0
        %v304 = vadd.f32 %v280, %v303
        %305 = vdwg.mxu0
        %306 = vmatpush.msra.mxu0 0.0
        %307 = vmatpush.msra.mxu0 0.0
        %308 = vmatpush.msra.mxu0 0.0
        %309 = vmatpush.msra.mxu0 0.0
        %310 = vmatpush.msra.mxu0 0.0
        %311 = vmatpush.msra.mxu0 0.0
        %312 = vmatpush.msra.mxu0 0.0
        %313 = vmatpush.msra.mxu0 0.0
        %314 = vmatpush.msra.mxu0 0.0
        %315 = vmatpush.msra.mxu0 0.0
        %316 = vmatpush.msra.mxu0 0.0
        %317 = vmatpush.msra.mxu0 0.0
        %318 = vmatpush.msra.mxu0 %v274
        %319 = vmatpush.msra.mxu0 %v272
        %320 = vmatpush.msra.mxu0 %v270
        %321 = vmatpush.msra.mxu0 %v268
        %322 = vmatmul.f32.gmra.mxu0 %v284
        %v323 = vpop.f32.mrf.mxu0
        %v324 = vadd.f32 %v280, %v323
        %325 = vdwg.mxu0
        %v326 = vmax.f32 %v304, 0.0
        %v327 = vmax.f32 %v324, 0.0
        %v328 = vld [vmem:[%s3] sm:$0xf]
        %330 = vset.pattern.permute.xlu0 0
        %331 = vperm.xlu0 %330, %v328
        %v332 = vpop.permute.xlu0 %331
        %v334 = vmul.f32 %v326, %v332
        %v335 = vmul.f32 %v327, %v332
        %vm336 = vcmask 1043456
        %v337 = vsel %vm336, %v334, 0.0
        %v338 = vrot.slane %v337, 4
        %v339 = vadd.f32 %v337, %v338
        %v340 = vrot.slane %v339, 2
        %v341 = vadd.f32 %v339, %v340
        %v342 = vrot.slane %v341, 1
        %v343 = vadd.f32 %v341, %v342
        %v344 = vsel %vm336, %v335, 0.0
        %v345 = vrot.slane %v344, 4
        %v346 = vadd.f32 %v344, %v345
        %v347 = vrot.slane %v346, 2
        %v348 = vadd.f32 %v346, %v347
        %v349 = vrot.slane %v348, 1
        %v350 = vadd.f32 %v348, %v349
        %v351 = vld [vmem:[#allocation2] sm:$0x1]
        %353 = vset.pattern.permute.xlu0 0
        %354 = vperm.xlu0 %353, %v351
        %v355 = vpop.permute.xlu0 %354
        %v357 = vperm.slane %v355, 0
        %v358 = vadd.f32 %v343, %v357
        %v359 = vadd.f32 %v350, %v357
        %v360 = vsub.f32 0.0, %v358
        %v361 = vsub.f32 0.0, %v359
        %v362 = vmul.f32 %v360, 1.442695
        %v363 = vpow.pop %v362
        %v364 = vmul.f32 %v361, 1.442695
        %v365 = vpow.pop %v364
        %v366 = vadd.f32 %v363, 1.0
        %v367 = vadd.f32 %v365, 1.0
        %v368 = vrcp.pop %v366
        %v369 = vmul.f32 %v366, %v368
        %v370 = vsub.f32 1.0, %v369
        %v371 = vmul.f32 %v368, %v370
        %v372 = vadd.f32 %v368, %v371
        %vm373 = vweird.f32 %v366
        %vm374 = vweird.f32 %v368
        %vm375 = vmor %vm373, %vm374
        %v376 = vsel %vm375, %v368, %v372
        %v377 = vand.u32 2147483647, %v366
        %vm378 = vcmp.eq.f32.partialorder %v377, 8.507059e+37
        %v379 = vand.u32 %v366, 2147483648
        %v380 = vor.u32 1.1754944e-38, %v379
        %v381 = vsel %vm378, %v380, %v376
        %v382 = vmul.f32 1.0, %v381
        %v383 = vrcp.pop %v367
        %v384 = vmul.f32 %v367, %v383
        %v385 = vsub.f32 1.0, %v384
        %v386 = vmul.f32 %v383, %v385
        %v387 = vadd.f32 %v383, %v386
        %vm388 = vweird.f32 %v367
        %vm389 = vweird.f32 %v383
        %vm390 = vmor %vm388, %vm389
        %v391 = vsel %vm390, %v383, %v387
        %v392 = vand.u32 2147483647, %v367
        %vm393 = vcmp.eq.f32.partialorder %v392, 8.507059e+37
        %v394 = vand.u32 %v367, 2147483648
        %v395 = vor.u32 1.1754944e-38, %v394
        %v396 = vsel %vm393, %v395, %v391
        %v397 = vmul.f32 1.0, %v396
        %v398 = vmul.f32 %v267, %v382
        %v399 = vmul.f32 %v268, %v397
        %v400 = vmul.f32 %v269, %v382
        %v401 = vmul.f32 %v270, %v397
        %v402 = vmul.f32 %v271, %v382
        %v403 = vmul.f32 %v272, %v397
        %v404 = vmul.f32 %v273, %v382
        %v405 = vmul.f32 %v274, %v397
        %406 = vst [vmem:[%s264] sm:$0xff] %v398
        %407 = vst [vmem:[%s264 + $0x8] sm:$0xff] %v399
        %408 = vst [vmem:[%s264 + $0x10] sm:$0xff] %v400
        %409 = vst [vmem:[%s264 + $0x18] sm:$0xff] %v401
        %410 = vst [vmem:[%s264 + $0x20] sm:$0xff] %v402
        %411 = vst [vmem:[%s264 + $0x28] sm:$0xff] %v403
        %412 = vst [vmem:[%s264 + $0x30] sm:$0xff] %v404
        %413 = vst [vmem:[%s264 + $0x38] sm:$0xff] %v405
        %s414 = sand.u32 %s158, 1
        %s415 = scalar_lea.sflag [#allocation5], %s414
        %s416 = sand.u32 %s158, 1
        %s417 = smul.addr %s416, 64
        %s418 = scalar_lea.vmem [#allocation6], %s417
        // Predicated region
        $region45: #{tpu_custom_call.1} parent=39 // pred_check
          %p419 = pneg %p168
        $region46: #{tpu_custom_call.1} parent=39 // pred_check_branch
          %421 = sbr.rel (%p419) target = $region48
        $region47: #{tpu_custom_call.1} parent=39 // pred_region
          %s422 = smul.u32 2, %s29
          %424 = vsyncadd %s415, 0
          %s425 = smul.addr %s28, 8
          %s426 = sadd.s32 %s422, %s425
          %s427 = smul.addr %s426, 8
          %s428 = scalar_lea.hbm %s5, %s427
          %s429 = sshll.u32 %s418, 4
          %s430 = int_to_ptr.vmem [resolvable:$true] %s429
          %s431 = sshll.u32 %s428, 4
          %s432 = int_to_ptr.hbm [resolvable:$true] %s431
          %437 = dma.vmem_to_hbm [thread:$0]  %s430, 1024, %s432, %s415, 256, 256, 16
        $region48: #{tpu_custom_call.1} parent=39 // pred_fallthru
          _
      $region40: #{tpu_custom_call.1} parent=5 // pred_fallthru
        _
      %p438 = scmp.le.s32.totalorder 2, %s19
      // Predicated region
      $region49: #{tpu_custom_call.1} parent=5 // pred_check
        %p439 = pneg %p438
      $region50: #{tpu_custom_call.1} parent=5 // pred_check_branch
        %441 = sbr.rel (%p439) target = $region52
      $region51: #{tpu_custom_call.1} parent=5 // pred_region
        %s442 = ssub.s32 %s19, 2
        // Predicated region
        $region53: #{tpu_custom_call.1} parent=51 // pred_check
          %p443 = pneg %p174
        $region54: #{tpu_custom_call.1} parent=51 // pred_check_branch
          %445 = sbr.rel (%p443) target = $region56
        $region55: #{tpu_custom_call.1} parent=51 // pred_region
          %s446 = sand.u32 %s159, 1
          %s447 = scalar_lea.sflag [#allocation5], %s446
          %s448 = sand.u32 %s159, 1
          %s449 = smul.addr %s448, 64
          %s450 = scalar_lea.vmem [#allocation6], %s449
          %452 = dma.done %s447, 1024
        $region56: #{tpu_custom_call.1} parent=51 // pred_fallthru
          _
      $region52: #{tpu_custom_call.1} parent=5 // pred_fallthru
        _
    $region6: #{tpu_custom_call.1} parent=1 // loop_footer
      %s23 = sadd.s32 1, %s19
    $region7: #{tpu_custom_call.1} parent=1 // loop_footer_branch
      %18 = sbr.rel target = $region3
    $region8: #{tpu_custom_call.1} parent=1 // loop_exit
      _
    %453 = vsyncpa [#allocation4], 1
    %s454 = scalar_lea.sflag [#allocation4], 1
    %455 = vsyncpa %s454, 1
    %456 = vsyncpa [#allocation5], 1
    %s457 = scalar_lea.sflag [#allocation5], 1
    %458 = vsyncpa %s457, 1

</llo_original>
